<compile_context>
chip_gen: v6e
topology: v6e:2x2x1
jax: 0.10.0
libtpu: 0.0.40
codegen_flags: <defaults>
</compile_context>

<pallas_src>
import jax
import jax.numpy as jnp
from jax.experimental import pallas as pl
from jax.experimental.pallas import tpu as pltpu


def _round_up(x, m):
    return (x + m - 1) // m * m


def _sbpr_loss_kernel(fscal_ref, iscal_ref, u_ref, p_ref, s_ref, n_ref, part_ref):
    """One (TB, D) tile: row-wise dots, stable -log(sigmoid), masked partial sum."""
    i = pl.program_id(0)

    inv_coeff = fscal_ref[0]          # 1 / (social_coeff + 1)
    n_valid = iscal_ref[0]            # true batch size (padded rows masked out)

    # Load tile and upcast to f32 (inputs may be bf16 for HBM-traffic savings;
    # f32 compute keeps v5e happy — no bf16 VPU there).
    u = u_ref[...].astype(jnp.float32)
    p = p_ref[...].astype(jnp.float32)
    s = s_ref[...].astype(jnp.float32)
    n = n_ref[...].astype(jnp.float32)

    # Two row-wise dot products instead of three:
    #   d_ik = <u, p - s> = x_ui - x_uk ; d_kj = <u, s - n> = x_uk - x_uj
    # VPU multiply + XLU lane reduce; MXU would waste TB^2 work on a mem-bound op.
    d_ik = jnp.sum(u * (p - s), axis=-1, keepdims=True)     # (TB, 1)
    d_kj = jnp.sum(u * (s - n), axis=-1, keepdims=True)     # (TB, 1)

    x_uik = d_ik * inv_coeff
    x_ukj = d_kj

    # Numerically stable -log(sigmoid(x)) = softplus(-x)
    #   = max(-x, 0) + log1p(exp(-|x|))   (no inf/NaN for large |x|).
    def neg_log_sigmoid(x):
        return jnp.maximum(-x, 0.0) + jnp.log1p(jnp.exp(-jnp.abs(x)))

    loss = neg_log_sigmoid(x_uik) + neg_log_sigmoid(x_ukj)  # (TB, 1)

    # Mask rows padded beyond the true batch size (zero rows would add 2*ln2).
    tb = loss.shape[0]
    row = jax.lax.broadcasted_iota(jnp.int32, (tb, 1), 0) + i * tb
    loss = jnp.where(row < n_valid, loss, 0.0)

    # Per-tile partial sum. Each grid step owns its own (1, 8, 128) output
    # block, so the grid axis can be "parallel" (both TensorCores on v7x).
    # The splat is a full, unmasked vreg store; the wrapper reads [:, 0, 0].
    part_ref[...] = jnp.full(part_ref.shape, jnp.sum(loss), dtype=part_ref.dtype)


def sbpr_loss(user_emb, pos_emb, soc_emb, neg_emb, social_coeff, *,
              block_rows=None):
    """All embedding args are (B, D) float32/bfloat16; social_coeff is a scalar."""
    B, D = user_emb.shape
    itemsize = jnp.dtype(user_emb.dtype).itemsize

    # Tile sizing: biggest tile that keeps the double-buffered input footprint
    # (4 streams x 2 pipeline buffers) under ~16 MiB; (8, ...) aligned; capped.
    if block_rows is None:
        budget = 16 << 20
        block_rows = budget // (4 * 2 * D * itemsize)
        block_rows = max(8, min(4096, (block_rows // 8) * 8))
    TB = min(int(block_rows), _round_up(B, 8))
    TB = max(8, (TB // 8) * 8)
    B_pad = _round_up(B, TB)
    if B_pad != B:
        pad = ((0, B_pad - B), (0, 0))
        user_emb = jnp.pad(user_emb, pad)
        pos_emb = jnp.pad(pos_emb, pad)
        soc_emb = jnp.pad(soc_emb, pad)
        neg_emb = jnp.pad(neg_emb, pad)
    num_tiles = B_pad // TB

    # Hoisted scalars (SMEM): 1/(coeff+1); true B for the padded-row mask.
    fscal = jnp.reshape(1.0 / (jnp.asarray(social_coeff, jnp.float32) + 1.0), (1,))
    iscal = jnp.asarray([B], dtype=jnp.int32)

    emb_spec = pl.BlockSpec((TB, D), lambda i: (i, 0))

    # VMEM budget: 4 inputs x 2 pipeline buffers x tile + output blocks + slack.
    needed = 4 * 2 * TB * D * itemsize + 2 * 8 * 128 * 4
    vmem_limit = int(min(max(needed + (4 << 20), 16 << 20), 48 << 20))

    partials = pl.pallas_call(
        _sbpr_loss_kernel,
        out_shape=jax.ShapeDtypeStruct((num_tiles, 8, 128), jnp.float32),
        grid=(num_tiles,),
        in_specs=[
            pl.BlockSpec(memory_space=pltpu.SMEM),   # fscal: [1/(coeff+1)]
            pl.BlockSpec(memory_space=pltpu.SMEM),   # iscal: [true B]
            emb_spec, emb_spec, emb_spec, emb_spec,  # u, p, s, n tiles
        ],
        out_specs=pl.BlockSpec((1, 8, 128), lambda i: (i, 0, 0)),
        compiler_params=pltpu.CompilerParams(
            # Independent per-tile partials -> truly parallel grid axis:
            # shards across both TensorCores on v7x, neutral on v5e/v6e.
            dimension_semantics=("parallel",),
            vmem_limit_bytes=vmem_limit,
        ),
    )(fscal, iscal, user_emb, pos_emb, soc_emb, neg_emb)

    # Tiny final reduce over num_tiles scalars + mean normalization (XLA glue).
    return jnp.sum(partials[:, 0, 0]) * (1.0 / B)


if __name__ == "__main__":
    key = jax.random.PRNGKey(0)
    k_user, k_item, k_u, k_p, k_s, k_n = jax.random.split(key, 6)

    num_users, num_items, emb_dim = 16, 20, 32
    batch = 20
    social_coeff = 2  # int per the module docstring

    # Deterministic synthetic "model" parameters (MF embedding tables).
    user_table = jax.random.normal(k_user, (num_users, emb_dim), dtype=jnp.float32) * 0.1
    item_table = jax.random.normal(k_item, (num_items, emb_dim), dtype=jnp.float32) * 0.1

    users = jax.random.randint(k_u, (batch,), 0, num_users)
    pos_items = jax.random.randint(k_p, (batch,), 0, num_items)
    social_items = jax.random.randint(k_s, (batch,), 0, num_items)
    neg_items = jax.random.randint(k_n, (batch,), 0, num_items)

    # Glue: embedding gathers in plain JAX (the generic `model(users, items)`
    # callable of the PyTorch spec is realized as an MF dot-product scorer).
    # TODO(synk): fuse these gathers into the kernel (scalar-prefetch row indices
    # + manual DMA from the HBM tables) to avoid materializing and re-reading the
    # four (B, D) arrays; also pad D to a multiple of 128 for lane-dense vregs.
    u_emb = user_table[users]
    p_emb = item_table[pos_items]
    s_emb = item_table[social_items]
    n_emb = item_table[neg_items]

    # block_rows=8 so this small demo exercises the multi-tile grid path,
    # the per-tile partial sums and the padded-row masking (20 -> 3 tiles of 8).
    loss = sbpr_loss(u_emb, p_emb, s_emb, n_emb, social_coeff, block_rows=8)
    jax.block_until_ready(loss)

    # Pure-JAX reference check (mirrors the PyTorch module).
    x_ui = jnp.sum(u_emb * p_emb, axis=-1)
    x_uk = jnp.sum(u_emb * s_emb, axis=-1)
    x_uj = jnp.sum(u_emb * n_emb, axis=-1)
    x_uik = (x_ui - x_uk) / (social_coeff + 1)
    x_ukj = x_uk - x_uj
    ref = jnp.mean(-jnp.log(jax.nn.sigmoid(x_uik)) - jnp.log(jax.nn.sigmoid(x_ukj)))
    assert jnp.allclose(loss, ref, rtol=1e-5, atol=1e-6), (loss, ref)

    print("KERNEL_OK")
</pallas_src>

<mosaic_0001>
module attributes {stable_mosaic.version = 11 : i64} {
  func.func @_sbpr_loss_kernel(%arg0: i32, %arg1: memref<1xf32, #tpu.memory_space<smem>>, %arg2: memref<1xi32, #tpu.memory_space<smem>>, %arg3: memref<8x32xf32, #tpu.memory_space<vmem>>, %arg4: memref<8x32xf32, #tpu.memory_space<vmem>>, %arg5: memref<8x32xf32, #tpu.memory_space<vmem>>, %arg6: memref<8x32xf32, #tpu.memory_space<vmem>>, %arg7: memref<1x8x128xf32, #tpu.memory_space<vmem>>) attributes {dimension_semantics = [#tpu.dimension_semantics<parallel>], iteration_bounds = array<i64: 3>, scalar_prefetch = 0 : i64, scratch_operands = 0 : i64, tpu.core_type = #tpu.core_type<tc>, window_params = [{transform_indices = @transform_0, window_bounds = array<i64: 1>}, {transform_indices = @transform_1, window_bounds = array<i64: 1>}, {transform_indices = @transform_2, window_bounds = array<i64: 8, 32>}, {transform_indices = @transform_3, window_bounds = array<i64: 8, 32>}, {transform_indices = @transform_4, window_bounds = array<i64: 8, 32>}, {transform_indices = @transform_5, window_bounds = array<i64: 8, 32>}, {transform_indices = @transform_6, window_bounds = array<i64: 1, 8, 128>}]} {
    %c0 = arith.constant 0 : index
    %0 = memref.load %arg1[%c0] : memref<1xf32, #tpu.memory_space<smem>>
    %c0_0 = arith.constant 0 : index
    %1 = memref.load %arg2[%c0_0] : memref<1xi32, #tpu.memory_space<smem>>
    %c0_1 = arith.constant 0 : index
    %c0_2 = arith.constant 0 : index
    %2 = vector.load %arg3[%c0_1, %c0_2] : memref<8x32xf32, #tpu.memory_space<vmem>>, vector<8x32xf32>
    %c0_3 = arith.constant 0 : index
    %c0_4 = arith.constant 0 : index
    %3 = vector.load %arg4[%c0_3, %c0_4] : memref<8x32xf32, #tpu.memory_space<vmem>>, vector<8x32xf32>
    %c0_5 = arith.constant 0 : index
    %c0_6 = arith.constant 0 : index
    %4 = vector.load %arg5[%c0_5, %c0_6] : memref<8x32xf32, #tpu.memory_space<vmem>>, vector<8x32xf32>
    %c0_7 = arith.constant 0 : index
    %c0_8 = arith.constant 0 : index
    %5 = vector.load %arg6[%c0_7, %c0_8] : memref<8x32xf32, #tpu.memory_space<vmem>>, vector<8x32xf32>
    %6 = arith.subf %3, %4 : vector<8x32xf32>
    %7 = arith.mulf %2, %6 : vector<8x32xf32>
    %cst = arith.constant dense<0.000000e+00> : vector<8xf32>
    %8 = vector.multi_reduction <add>, %7, %cst [1] : vector<8x32xf32> to vector<8xf32>
    %9 = vector.shape_cast %8 : vector<8xf32> to vector<8x1xf32>
    %10 = arith.subf %4, %5 : vector<8x32xf32>
    %11 = arith.mulf %2, %10 : vector<8x32xf32>
    %cst_9 = arith.constant dense<0.000000e+00> : vector<8xf32>
    %12 = vector.multi_reduction <add>, %11, %cst_9 [1] : vector<8x32xf32> to vector<8xf32>
    %13 = vector.shape_cast %12 : vector<8xf32> to vector<8x1xf32>
    %14 = vector.broadcast %0 : f32 to vector<8x1xf32>
    %15 = arith.mulf %9, %14 : vector<8x1xf32>
    %cst_10 = arith.constant 0.000000e+00 : f32
    %16 = vector.broadcast %cst_10 : f32 to vector<8x1xf32>
    %17 = arith.subf %16, %15 : vector<8x1xf32>
    %cst_11 = arith.constant 0.000000e+00 : f32
    %18 = vector.broadcast %cst_11 : f32 to vector<8x1xf32>
    %19 = arith.maximumf %17, %18 : vector<8x1xf32>
    %20 = math.absf %15 : vector<8x1xf32>
    %cst_12 = arith.constant 0.000000e+00 : f32
    %21 = vector.broadcast %cst_12 : f32 to vector<8x1xf32>
    %22 = arith.subf %21, %20 : vector<8x1xf32>
    %23 = math.exp %22 : vector<8x1xf32>
    %24 = math.log1p %23 : vector<8x1xf32>
    %25 = arith.addf %19, %24 : vector<8x1xf32>
    %cst_13 = arith.constant 0.000000e+00 : f32
    %26 = vector.broadcast %cst_13 : f32 to vector<8x1xf32>
    %27 = arith.subf %26, %13 : vector<8x1xf32>
    %cst_14 = arith.constant 0.000000e+00 : f32
    %28 = vector.broadcast %cst_14 : f32 to vector<8x1xf32>
    %29 = arith.maximumf %27, %28 : vector<8x1xf32>
    %30 = math.absf %13 : vector<8x1xf32>
    %cst_15 = arith.constant 0.000000e+00 : f32
    %31 = vector.broadcast %cst_15 : f32 to vector<8x1xf32>
    %32 = arith.subf %31, %30 : vector<8x1xf32>
    %33 = math.exp %32 : vector<8x1xf32>
    %34 = math.log1p %33 : vector<8x1xf32>
    %35 = arith.addf %29, %34 : vector<8x1xf32>
    %36 = arith.addf %25, %35 : vector<8x1xf32>
    %37 = tpu.iota {dimensions = array<i32: 0>} : vector<8x1xi32>
    %c8_i32 = arith.constant 8 : i32
    %38 = arith.muli %arg0, %c8_i32 : i32
    %39 = vector.broadcast %38 : i32 to vector<8x1xi32>
    %40 = arith.addi %37, %39 : vector<8x1xi32>
    %41 = vector.broadcast %1 : i32 to vector<8x1xi32>
    %42 = arith.cmpi slt, %40, %41 : vector<8x1xi32>
    %cst_16 = arith.constant 0.000000e+00 : f32
    %43 = vector.broadcast %cst_16 : f32 to vector<8x1xf32>
    %44 = arith.select %42, %36, %43 : vector<8x1xi1>, vector<8x1xf32>
    %45 = vector.shape_cast %44 : vector<8x1xf32> to vector<1x8x1xf32>
    %cst_17 = arith.constant dense<0.000000e+00> : vector<1xf32>
    %46 = vector.multi_reduction <add>, %45, %cst_17 [1, 2] : vector<1x8x1xf32> to vector<1xf32>
    %47 = vector.shape_cast %46 : vector<1xf32> to vector<1x1x1xf32>
    %48 = vector.extract %47[0, 0, 0] : f32 from vector<1x1x1xf32>
    %49 = vector.broadcast %48 : f32 to vector<1x8x128xf32>
    %c0_18 = arith.constant 0 : index
    %c0_19 = arith.constant 0 : index
    %c0_20 = arith.constant 0 : index
    %50 = vector.load %arg7[%c0_18, %c0_19, %c0_20] : memref<1x8x128xf32, #tpu.memory_space<vmem>>, vector<1x8x128xf32>
    tpu.vector_store %arg7[%c0_18, %c0_19, %c0_20], %49 {strides = array<i32>} : memref<1x8x128xf32, #tpu.memory_space<vmem>>, vector<1x8x128xf32>,
    return
  }
  func.func @transform_0(%arg0: i32) -> i32 {
    %c0_i32 = arith.constant 0 : i32
    %c0_i32_0 = arith.constant 0 : i32
    return %c0_i32 : i32
  }
  func.func @transform_1(%arg0: i32) -> i32 {
    %c0_i32 = arith.constant 0 : i32
    %c0_i32_0 = arith.constant 0 : i32
    return %c0_i32 : i32
  }
  func.func @transform_2(%arg0: i32) -> (i32, i32) {
    %c0_i32 = arith.constant 0 : i32
    %c0_i32_0 = arith.constant 0 : i32
    return %arg0, %c0_i32 : i32, i32
  }
  func.func @transform_3(%arg0: i32) -> (i32, i32) {
    %c0_i32 = arith.constant 0 : i32
    %c0_i32_0 = arith.constant 0 : i32
    return %arg0, %c0_i32 : i32, i32
  }
  func.func @transform_4(%arg0: i32) -> (i32, i32) {
    %c0_i32 = arith.constant 0 : i32
    %c0_i32_0 = arith.constant 0 : i32
    return %arg0, %c0_i32 : i32, i32
  }
  func.func @transform_5(%arg0: i32) -> (i32, i32) {
    %c0_i32 = arith.constant 0 : i32
    %c0_i32_0 = arith.constant 0 : i32
    return %arg0, %c0_i32 : i32, i32
  }
  func.func @transform_6(%arg0: i32) -> (i32, i32, i32) {
    %c0_i32 = arith.constant 0 : i32
    %c0_i32_0 = arith.constant 0 : i32
    %c0_i32_1 = arith.constant 0 : i32
    return %arg0, %c0_i32, %c0_i32_0 : i32, i32, i32
  }
}

</mosaic_0001>

<llo_original>
// kernel: tpu_custom_call.1
$region0: #{tpu_custom_call.1}
  #allocation0 [shape = 'u32[]', space=smem, size = 0x4, offset = 0x4, fixed_abs, tag = 'smem constant byte address 0x4 - core index']
  #allocation1 [shape = 'u32[144,128]{1,0:T(1,128)}', space=vmem, size = 0x12000, scoped, tag = 'internal scratch']
  #allocation2 [shape = 'f32[1]{0:T(128)S(6)}', space=smem, size = 0x200, scoped, tag = 'scoped memory for tpu_custom_call.1']
  #allocation3 [shape = 's32[1]{0:T(128)S(6)}', space=smem, size = 0x200, scoped, tag = 'scoped memory for tpu_custom_call.1']
  %s0 = inlined_call_operand.<no memory space> [shape: f32[1], index: 0, kind: input, shape index: {}]
  %s1 = inlined_call_operand.<no memory space> [shape: s32[1], index: 1, kind: input, shape index: {}]
  %s2 = inlined_call_operand.hbm [shape: f32[24,32], index: 2, kind: input, shape index: {}]
  %s3 = inlined_call_operand.hbm [shape: f32[24,32], index: 3, kind: input, shape index: {}]
  %s4 = inlined_call_operand.hbm [shape: f32[24,32], index: 4, kind: input, shape index: {}]
  %s5 = inlined_call_operand.hbm [shape: f32[24,32], index: 5, kind: input, shape index: {}]
  %s6 = inlined_call_operand.hbm [shape: f32[3,8,128], index: 6, kind: output, shape index: {}]
  %s7 = sld [smem:[#allocation0]]
  $region73: #{tpu_custom_call.1} parent=0
    _
  %s9 = ssub.s32 1, %s7
  %s10 = scalar_select 0, %s9, %s7
  %11 = sst [smem:[#allocation2]] %s0
  %12 = sst [smem:[#allocation3]] %s1
  $region1: #{tpu_custom_call.1} parent=0
    #allocation4 [shape = 'u8[8192]{0}', space=vmem, size = 0x2000, scoped, tag = 'input window, operand 2']
    #allocation5 [shape = 's32[2]{0}', space=sflag, size = 0x8, scoped, tag = 'scoped memory for tpu_custom_call.1']
    #allocation6 [shape = 's32[2]{0}', space=sflag, size = 0x8, scoped, tag = 'scoped memory for tpu_custom_call.1']
    #allocation7 [shape = 'u8[8192]{0}', space=vmem, size = 0x2000, scoped, tag = 'input window, operand 3']
    #allocation8 [shape = 's32[2]{0}', space=sflag, size = 0x8, scoped, tag = 'scoped memory for tpu_custom_call.1']
    #allocation9 [shape = 'u8[8192]{0}', space=vmem, size = 0x2000, scoped, tag = 'input window, operand 4']
    #allocation10 [shape = 'u8[8192]{0}', space=vmem, size = 0x2000, scoped, tag = 'input window, operand 5']
    #allocation11 [shape = 's32[2]{0}', space=sflag, size = 0x8, scoped, tag = 'scoped memory for tpu_custom_call.1']
    #allocation12 [shape = 'u8[8192]{0}', space=vmem, size = 0x2000, scoped, tag = 'output window, operand 0']
    %13 = vsyncpa [#allocation5], 0
    %s14 = scalar_lea.sflag [#allocation5], 1
    %15 = vsyncpa %s14, 0
    %16 = vsyncpa [#allocation8], 0
    %s17 = scalar_lea.sflag [#allocation8], 1
    %18 = vsyncpa %s17, 0
    %19 = vsyncpa [#allocation11], 0
    %s20 = scalar_lea.sflag [#allocation11], 1
    %21 = vsyncpa %s20, 0
    %22 = vsyncpa [#allocation6], 0
    %s23 = scalar_lea.sflag [#allocation6], 1
    %24 = vsyncpa %s23, 0
    loop: start=0, step=1, limit=5
    $region2: #{tpu_custom_call.1} parent=1 // loop_pre_header
      _
    $region3: #{tpu_custom_call.1} parent=1 // loop_header
      %s26 = sphi 0, %s30
      %p27 = scmp.ge.s32.totalorder %s26, 5
      %s34 = sphi 0, %s34
      %s36 = sphi 0, %s34
      %s37 = sphi 0, %s36
      %s51 = sphi 0, %s37
      %s55 = sphi 0, %s55
      %s57 = sphi 0, %s55
      %s58 = sphi 0, %s57
      %s72 = sphi 0, %s58
      %s78 = sphi 0, %s80
      %s81 = sphi 0, %s78
      %s82 = sphi 0, %s81
      %s98 = sphi 0, %s82
      %s104 = sphi 0, %s106
      %s107 = sphi 0, %s104
      %s108 = sphi 0, %s107
      %s124 = sphi 0, %s108
      %s130 = sphi 0, %s132
      %s133 = sphi 0, %s130
      %s134 = sphi 0, %s133
      %s150 = sphi 0, %s134
      %s156 = sphi 0, %s158
      %s159 = sphi 0, %s156
      %s160 = sphi 0, %s159
      %s176 = sphi 0, %s160
      %s182 = sphi 0, %s184
      %s185 = sphi 0, %s182
      %s186 = sphi 0, %s185
      %s202 = sphi 0, %s186
    $region4: #{tpu_custom_call.1} parent=1 // loop_header_branch
      %29 = sbr.rel (%p27) target = $region8
    $region5: #{tpu_custom_call.1} parent=1 // loop_body
      %s31 = ssub.s32 %s26, 1
      %s32 = ssub.s32 %s26, 2
      %s33 = sadd.s32 %s26, 1
      %s35 = sadd.s32 %s34, 1
      %p38 = scmp.eq.s32.totalorder %s26, 2
      %p39 = scmp.ne.s32.totalorder %s34, %s36
      %p40 = scmp.eq.s32.totalorder %s26, 0
      %p41 = por %p39, %p40
      %p42 = scmp.ne.s32.totalorder %s34, %s36
      %p43 = scmp.eq.s32.totalorder %s31, 2
      %p44 = por %p42, %p43
      %p45 = scmp.ne.s32.totalorder %s36, %s37
      %p46 = scmp.eq.s32.totalorder %s31, 0
      %p47 = por %p45, %p46
      %p48 = scmp.ne.s32.totalorder %s36, %s37
      %p49 = scmp.eq.s32.totalorder %s32, 2
      %p50 = por %p48, %p49
      %p52 = scmp.ne.s32.totalorder %s37, %s51
      %p53 = scmp.eq.s32.totalorder %s32, 0
      %p54 = por %p52, %p53
      %s56 = sadd.s32 %s55, 1
      %p59 = scmp.eq.s32.totalorder %s26, 2
      %p60 = scmp.ne.s32.totalorder %s55, %s57
      %p61 = scmp.eq.s32.totalorder %s26, 0
      %p62 = por %p60, %p61
      %p63 = scmp.ne.s32.totalorder %s55, %s57
      %p64 = scmp.eq.s32.totalorder %s31, 2
      %p65 = por %p63, %p64
      %p66 = scmp.ne.s32.totalorder %s57, %s58
      %p67 = scmp.eq.s32.totalorder %s31, 0
      %p68 = por %p66, %p67
      %p69 = scmp.ne.s32.totalorder %s57, %s58
      %p70 = scmp.eq.s32.totalorder %s32, 2
      %p71 = por %p69, %p70
      %p73 = scmp.ne.s32.totalorder %s58, %s72
      %p74 = scmp.eq.s32.totalorder %s32, 0
      %p75 = por %p73, %p74
      %s76 = ssub.s32 %s26, %s33
      %p77 = scmp.eq.s32.totalorder %s76, 0
      %s79 = sadd.s32 %s78, 1
      %s80 = scalar_select %p77, %s78, %s79
      %p83 = pneg %p77
      %p84 = scmp.eq.s32.totalorder %s26, 2
      %p85 = por %p83, %p84
      %p86 = scmp.ne.s32.totalorder %s78, %s81
      %p87 = scmp.eq.s32.totalorder %s26, 0
      %p88 = por %p86, %p87
      %p89 = scmp.ne.s32.totalorder %s78, %s81
      %p90 = scmp.eq.s32.totalorder %s31, 2
      %p91 = por %p89, %p90
      %p92 = scmp.ne.s32.totalorder %s81, %s82
      %p93 = scmp.eq.s32.totalorder %s31, 0
      %p94 = por %p92, %p93
      %p95 = scmp.ne.s32.totalorder %s81, %s82
      %p96 = scmp.eq.s32.totalorder %s32, 2
      %p97 = por %p95, %p96
      %p99 = scmp.ne.s32.totalorder %s82, %s98
      %p100 = scmp.eq.s32.totalorder %s32, 0
      %p101 = por %p99, %p100
      %s102 = ssub.s32 %s26, %s33
      %p103 = scmp.eq.s32.totalorder %s102, 0
      %s105 = sadd.s32 %s104, 1
      %s106 = scalar_select %p103, %s104, %s105
      %p109 = pneg %p103
      %p110 = scmp.eq.s32.totalorder %s26, 2
      %p111 = por %p109, %p110
      %p112 = scmp.ne.s32.totalorder %s104, %s107
      %p113 = scmp.eq.s32.totalorder %s26, 0
      %p114 = por %p112, %p113
      %p115 = scmp.ne.s32.totalorder %s104, %s107
      %p116 = scmp.eq.s32.totalorder %s31, 2
      %p117 = por %p115, %p116
      %p118 = scmp.ne.s32.totalorder %s107, %s108
      %p119 = scmp.eq.s32.totalorder %s31, 0
      %p120 = por %p118, %p119
      %p121 = scmp.ne.s32.totalorder %s107, %s108
      %p122 = scmp.eq.s32.totalorder %s32, 2
      %p123 = por %p121, %p122
      %p125 = scmp.ne.s32.totalorder %s108, %s124
      %p126 = scmp.eq.s32.totalorder %s32, 0
      %p127 = por %p125, %p126
      %s128 = ssub.s32 %s26, %s33
      %p129 = scmp.eq.s32.totalorder %s128, 0
      %s131 = sadd.s32 %s130, 1
      %s132 = scalar_select %p129, %s130, %s131
      %p135 = pneg %p129
      %p136 = scmp.eq.s32.totalorder %s26, 2
      %p137 = por %p135, %p136
      %p138 = scmp.ne.s32.totalorder %s130, %s133
      %p139 = scmp.eq.s32.totalorder %s26, 0
      %p140 = por %p138, %p139
      %p141 = scmp.ne.s32.totalorder %s130, %s133
      %p142 = scmp.eq.s32.totalorder %s31, 2
      %p143 = por %p141, %p142
      %p144 = scmp.ne.s32.totalorder %s133, %s134
      %p145 = scmp.eq.s32.totalorder %s31, 0
      %p146 = por %p144, %p145
      %p147 = scmp.ne.s32.totalorder %s133, %s134
      %p148 = scmp.eq.s32.totalorder %s32, 2
      %p149 = por %p147, %p148
      %p151 = scmp.ne.s32.totalorder %s134, %s150
      %p152 = scmp.eq.s32.totalorder %s32, 0
      %p153 = por %p151, %p152
      %s154 = ssub.s32 %s26, %s33
      %p155 = scmp.eq.s32.totalorder %s154, 0
      %s157 = sadd.s32 %s156, 1
      %s158 = scalar_select %p155, %s156, %s157
      %p161 = pneg %p155
      %p162 = scmp.eq.s32.totalorder %s26, 2
      %p163 = por %p161, %p162
      %p164 = scmp.ne.s32.totalorder %s156, %s159
      %p165 = scmp.eq.s32.totalorder %s26, 0
      %p166 = por %p164, %p165
      %p167 = scmp.ne.s32.totalorder %s156, %s159
      %p168 = scmp.eq.s32.totalorder %s31, 2
      %p169 = por %p167, %p168
      %p170 = scmp.ne.s32.totalorder %s159, %s160
      %p171 = scmp.eq.s32.totalorder %s31, 0
      %p172 = por %p170, %p171
      %p173 = scmp.ne.s32.totalorder %s159, %s160
      %p174 = scmp.eq.s32.totalorder %s32, 2
      %p175 = por %p173, %p174
      %p177 = scmp.ne.s32.totalorder %s160, %s176
      %p178 = scmp.eq.s32.totalorder %s32, 0
      %p179 = por %p177, %p178
      %s180 = ssub.s32 %s26, %s33
      %p181 = scmp.eq.s32.totalorder %s180, 0
      %s183 = sadd.s32 %s182, 1
      %s184 = scalar_select %p181, %s182, %s183
      %p187 = pneg %p181
      %p188 = scmp.eq.s32.totalorder %s26, 2
      %p189 = por %p187, %p188
      %p190 = scmp.ne.s32.totalorder %s182, %s185
      %p191 = scmp.eq.s32.totalorder %s26, 0
      %p192 = por %p190, %p191
      %p193 = scmp.ne.s32.totalorder %s182, %s185
      %p194 = scmp.eq.s32.totalorder %s31, 2
      %p195 = por %p193, %p194
      %p196 = scmp.ne.s32.totalorder %s185, %s186
      %p197 = scmp.eq.s32.totalorder %s31, 0
      %p198 = por %p196, %p197
      %p199 = scmp.ne.s32.totalorder %s185, %s186
      %p200 = scmp.eq.s32.totalorder %s32, 2
      %p201 = por %p199, %p200
      %p203 = scmp.ne.s32.totalorder %s186, %s202
      %p204 = scmp.eq.s32.totalorder %s32, 0
      %p205 = por %p203, %p204
      %p206 = scmp.le.s32.totalorder 1, %s26
      %p207 = scmp.lt.s32.totalorder %s26, 4
      %p208 = pnand %p206, %p207
      %p209 = pneg %p208
      // Predicated region
      $region9: #{tpu_custom_call.1} parent=5 // pred_check
        _
      $region10: #{tpu_custom_call.1} parent=5 // pred_check_branch
        %211 = sbr.rel (%p208) target = $region12
      $region11: #{tpu_custom_call.1} parent=5 // pred_region
        %s212 = ssub.s32 %s26, 1
        // Predicated region
        $region13: #{tpu_custom_call.1} parent=11 // pred_check
          %p213 = pneg %p47
        $region14: #{tpu_custom_call.1} parent=11 // pred_check_branch
          %215 = sbr.rel (%p213) target = $region16
        $region15: #{tpu_custom_call.1} parent=11 // pred_region
          _
        $region16: #{tpu_custom_call.1} parent=11 // pred_fallthru
          _
        // Predicated region
        $region17: #{tpu_custom_call.1} parent=11 // pred_check
          %p216 = pneg %p68
        $region18: #{tpu_custom_call.1} parent=11 // pred_check_branch
          %218 = sbr.rel (%p216) target = $region20
        $region19: #{tpu_custom_call.1} parent=11 // pred_region
          _
        $region20: #{tpu_custom_call.1} parent=11 // pred_fallthru
          _
      $region12: #{tpu_custom_call.1} parent=5 // pred_fallthru
        _
      %p219 = scmp.lt.s32.totalorder %s26, 3
      // Predicated region
      $region21: #{tpu_custom_call.1} parent=5 // pred_check
        %p220 = pneg %p219
      $region22: #{tpu_custom_call.1} parent=5 // pred_check_branch
        %222 = sbr.rel (%p220) target = $region24
      $region23: #{tpu_custom_call.1} parent=5 // pred_region
        // Predicated region
        $region25: #{tpu_custom_call.1} parent=23 // pred_check
          %p223 = pneg %p88
        $region26: #{tpu_custom_call.1} parent=23 // pred_check_branch
          %225 = sbr.rel (%p223) target = $region28
        $region27: #{tpu_custom_call.1} parent=23 // pred_region
          %s226 = sand.u32 %s78, 1
          %s227 = scalar_lea.sflag [#allocation5], %s226
          %s228 = sand.u32 %s78, 1
          %s229 = smul.addr %s228, 8
          %s230 = scalar_lea.vmem [#allocation4], %s229
          %s232 = ssub.s32 128, 128
          %233 = vsyncadd %s227, %s232
          %s234 = smul.addr %s26, 128
          %s235 = scalar_lea.hbm %s2, %s234
          %s237 = sshll.u32 %s230, 4
          %s238 = int_to_ptr.vmem [resolvable:$true] %s237
          %240 = dma.hbm_to_vmem [thread:$0]  %s235, 128, %s238, %s227
        $region28: #{tpu_custom_call.1} parent=23 // pred_fallthru
          _
        // Predicated region
        $region29: #{tpu_custom_call.1} parent=23 // pred_check
          %p241 = pneg %p114
        $region30: #{tpu_custom_call.1} parent=23 // pred_check_branch
          %243 = sbr.rel (%p241) target = $region32
        $region31: #{tpu_custom_call.1} parent=23 // pred_region
          %s244 = sand.u32 %s26, 1
          %s245 = scalar_lea.sflag [#allocation8], %s244
          %s246 = sand.u32 %s104, 1
          %s247 = smul.addr %s246, 8
          %s248 = scalar_lea.vmem [#allocation7], %s247
          %s250 = ssub.s32 128, 128
          %251 = vsyncadd %s245, %s250
          %s252 = smul.addr %s26, 128
          %s253 = scalar_lea.hbm %s3, %s252
          %s255 = sshll.u32 %s248, 4
          %s256 = int_to_ptr.vmem [resolvable:$true] %s255
          %258 = dma.hbm_to_vmem [thread:$0]  %s253, 128, %s256, %s245
        $region32: #{tpu_custom_call.1} parent=23 // pred_fallthru
          _
        // Predicated region
        $region33: #{tpu_custom_call.1} parent=23 // pred_check
          %p259 = pneg %p140
        $region34: #{tpu_custom_call.1} parent=23 // pred_check_branch
          %261 = sbr.rel (%p259) target = $region36
        $region35: #{tpu_custom_call.1} parent=23 // pred_region
          %s262 = sand.u32 %s26, 1
          %s263 = scalar_lea.sflag [#allocation8], %s262
          %s264 = sand.u32 %s130, 1
          %s265 = smul.addr %s264, 8
          %s266 = scalar_lea.vmem [#allocation9], %s265
          %s268 = ssub.s32 128, 128
          %269 = vsyncadd %s263, %s268
          %s270 = smul.addr %s26, 128
          %s271 = scalar_lea.hbm %s4, %s270
          %s273 = sshll.u32 %s266, 4
          %s274 = int_to_ptr.vmem [resolvable:$true] %s273
          %276 = dma.hbm_to_vmem [thread:$0]  %s271, 128, %s274, %s263
        $region36: #{tpu_custom_call.1} parent=23 // pred_fallthru
          _
        // Predicated region
        $region37: #{tpu_custom_call.1} parent=23 // pred_check
          %p277 = pneg %p166
        $region38: #{tpu_custom_call.1} parent=23 // pred_check_branch
          %279 = sbr.rel (%p277) target = $region40
        $region39: #{tpu_custom_call.1} parent=23 // pred_region
          %s280 = sand.u32 %s156, 1
          %s281 = scalar_lea.sflag [#allocation11], %s280
          %s282 = sand.u32 %s156, 1
          %s283 = smul.addr %s282, 8
          %s284 = scalar_lea.vmem [#allocation10], %s283
          %s286 = ssub.s32 128, 128
          %287 = vsyncadd %s281, %s286
          %s288 = smul.addr %s26, 128
          %s289 = scalar_lea.hbm %s5, %s288
          %s291 = sshll.u32 %s284, 4
          %s292 = int_to_ptr.vmem [resolvable:$true] %s291
          %294 = dma.hbm_to_vmem [thread:$0]  %s289, 128, %s292, %s281
        $region40: #{tpu_custom_call.1} parent=23 // pred_fallthru
          _
      $region24: #{tpu_custom_call.1} parent=5 // pred_fallthru
        _
      %p295 = scmp.le.s32.totalorder 1, %s26
      %p296 = scmp.lt.s32.totalorder %s26, 4
      %p297 = pnand %p295, %p296
      %p298 = pneg %p297
      // Predicated region
      $region41: #{tpu_custom_call.1} parent=5 // pred_check
        _
      $region42: #{tpu_custom_call.1} parent=5 // pred_check_branch
        %300 = sbr.rel (%p297) target = $region44
      $region43: #{tpu_custom_call.1} parent=5 // pred_region
        %s301 = ssub.s32 %s26, 1
        %s302 = sand.u32 %s81, 1
        %s303 = scalar_lea.sflag [#allocation5], %s302
        %s304 = sand.u32 %s81, 1
        %s305 = smul.addr %s304, 8
        %s306 = scalar_lea.vmem [#allocation4], %s305
        // Predicated region
        $region45: #{tpu_custom_call.1} parent=43 // pred_check
          %p307 = pneg %p94
        $region46: #{tpu_custom_call.1} parent=43 // pred_check_branch
          %309 = sbr.rel (%p307) target = $region48
        $region47: #{tpu_custom_call.1} parent=43 // pred_region
          %310 = dma.done %s303, 128
        $region48: #{tpu_custom_call.1} parent=43 // pred_fallthru
          _
        %s311 = sand.u32 %s31, 1
        %s312 = scalar_lea.sflag [#allocation8], %s311
        %s313 = sand.u32 %s107, 1
        %s314 = smul.addr %s313, 8
        %s315 = scalar_lea.vmem [#allocation7], %s314
        // Predicated region
        $region49: #{tpu_custom_call.1} parent=43 // pred_check
          %p316 = pneg %p120
        $region50: #{tpu_custom_call.1} parent=43 // pred_check_branch
          %318 = sbr.rel (%p316) target = $region52
        $region51: #{tpu_custom_call.1} parent=43 // pred_region
          %319 = dma.done %s312, 128
        $region52: #{tpu_custom_call.1} parent=43 // pred_fallthru
          _
        %s320 = sand.u32 %s31, 1
        %s321 = scalar_lea.sflag [#allocation8], %s320
        %s322 = sand.u32 %s133, 1
        %s323 = smul.addr %s322, 8
        %s324 = scalar_lea.vmem [#allocation9], %s323
        // Predicated region
        $region53: #{tpu_custom_call.1} parent=43 // pred_check
          %p325 = pneg %p146
        $region54: #{tpu_custom_call.1} parent=43 // pred_check_branch
          %327 = sbr.rel (%p325) target = $region56
        $region55: #{tpu_custom_call.1} parent=43 // pred_region
          %328 = dma.done %s321, 128
        $region56: #{tpu_custom_call.1} parent=43 // pred_fallthru
          _
        %s329 = sand.u32 %s159, 1
        %s330 = scalar_lea.sflag [#allocation11], %s329
        %s331 = sand.u32 %s159, 1
        %s332 = smul.addr %s331, 8
        %s333 = scalar_lea.vmem [#allocation10], %s332
        // Predicated region
        $region57: #{tpu_custom_call.1} parent=43 // pred_check
          %p334 = pneg %p172
        $region58: #{tpu_custom_call.1} parent=43 // pred_check_branch
          %336 = sbr.rel (%p334) target = $region60
        $region59: #{tpu_custom_call.1} parent=43 // pred_region
          %337 = dma.done %s330, 128
        $region60: #{tpu_custom_call.1} parent=43 // pred_fallthru
          _
        %p338 = pneg %p47
        %p339 = pneg %p44
        %p340 = pneg %p68
        %p341 = pneg %p65
        %s342 = sand.u32 %s81, 1
        %s343 = scalar_lea.sflag [#allocation5], %s342
        %s344 = sand.u32 %s81, 1
        %s345 = smul.addr %s344, 8
        %s346 = scalar_lea.vmem [#allocation4], %s345
        %p347 = pneg %p94
        %p348 = pneg %p91
        %s349 = sand.u32 %s31, 1
        %s350 = scalar_lea.sflag [#allocation8], %s349
        %s351 = sand.u32 %s107, 1
        %s352 = smul.addr %s351, 8
        %s353 = scalar_lea.vmem [#allocation7], %s352
        %p354 = pneg %p120
        %p355 = pneg %p117
        %s356 = sand.u32 %s31, 1
        %s357 = scalar_lea.sflag [#allocation8], %s356
        %s358 = sand.u32 %s133, 1
        %s359 = smul.addr %s358, 8
        %s360 = scalar_lea.vmem [#allocation9], %s359
        %p361 = pneg %p146
        %p362 = pneg %p143
        %s363 = sand.u32 %s159, 1
        %s364 = scalar_lea.sflag [#allocation11], %s363
        %s365 = sand.u32 %s159, 1
        %s366 = smul.addr %s365, 8
        %s367 = scalar_lea.vmem [#allocation10], %s366
        %p368 = pneg %p172
        %p369 = pneg %p169
        %p370 = pneg %p198
        %p371 = pneg %p195
        %s372 = sand.u32 %s185, 1
        %s373 = scalar_lea.sflag [#allocation6], %s372
        %s374 = sand.u32 %s185, 1
        %s375 = smul.addr %s374, 8
        %s376 = scalar_lea.vmem [#allocation12], %s375
        %s377 = sld [smem:[#allocation2]]
        %s378 = sld [smem:[#allocation3]]
        %v379 = vld [vmem:[%s306] sm:$0xff]
        %v380 = vld [vmem:[%s315] sm:$0xff]
        %v381 = vld [vmem:[%s324] sm:$0xff]
        %v382 = vld [vmem:[%s333] sm:$0xff]
        %v383 = vsub.f32 %v380, %v381
        %v384 = vmul.f32 %v379, %v383
        %vm385 = vcmask 261120
        %v386 = vsel %vm385, %v384, 0.0
        %387 = vadd.xlane.f32.xlu0 %v386
        %v388 = vpop.xlane.xlu0 %387
        %v389 = vsub.f32 %v381, %v382
        %v390 = vmul.f32 %v379, %v389
        %v391 = vsel %vm385, %v390, 0.0
        %392 = vadd.xlane.f32.xlu0 %v391
        %v393 = vpop.xlane.xlu0 %392
        %v394 = vstv %s377
        %v395 = vmul.f32 %v388, %v394
        %v396 = vsub.f32 0.0, %v395
        %v397 = vmax.f32 %v396, 0.0
        %v398 = vand.u32 2147483647, %v395
        %v399 = vsub.f32 0.0, %v398
        %v400 = vmul.f32 %v399, 1.442695
        %v401 = vpow.pop %v400
        %v402 = vadd.f32 %v401, 1.0
        %v403 = vlog2.pop %v402
        %v404 = vmul.f32 %v403, 0.6931472
        %v405 = vmul.f32 -0.5, %v401
        %v406 = vadd.f32 %v405, 1.0
        %v407 = vmul.f32 %v406, %v401
        %v408 = vand.u32 2147483647, %v401
        %vm409 = vcmp.lt.f32.partialorder %v408, 0.0004427343
        %v410 = vsel %vm409, %v407, %v404
        %v411 = vadd.f32 %v397, %v410
        %v412 = vsub.f32 0.0, %v393
        %v413 = vmax.f32 %v412, 0.0
        %v414 = vand.u32 2147483647, %v393
        %v415 = vsub.f32 0.0, %v414
        %v416 = vmul.f32 %v415, 1.442695
        %v417 = vpow.pop %v416
        %v418 = vadd.f32 %v417, 1.0
        %v419 = vlog2.pop %v418
        %v420 = vmul.f32 %v419, 0.6931472
        %v421 = vmul.f32 -0.5, %v417
        %v422 = vadd.f32 %v421, 1.0
        %v423 = vmul.f32 %v422, %v417
        %v424 = vand.u32 2147483647, %v417
        %vm425 = vcmp.lt.f32.partialorder %v424, 0.0004427343
        %v426 = vsel %vm425, %v423, %v420
        %v427 = vadd.f32 %v413, %v426
        %v428 = vadd.f32 %v411, %v427
        %v429 = vlaneseq
        %v430 = vshrl.u32 %v429, 7
        %s431 = smul.u32 %s31, 8
        %v432 = vstv %s431
        %v433 = vadd.s32 %v430, %v432
        %v434 = vstv %s378
        %vm435 = vcmp.lt.s32.totalorder %v433, %v434
        %v436 = vsel %vm435, %v428, 0.0
        %vm437 = vcmask 7168
        %v438 = vsel %vm437, %v436, 0.0
        %439 = vadd.xlane.f32.xlu0 %v438
        %v440 = vpop.xlane.xlu0 %439
        %v441 = vrot.slane %v440, 4
        %v442 = vadd.f32 %v440, %v441
        %v443 = vrot.slane %v442, 2
        %v444 = vadd.f32 %v442, %v443
        %v445 = vrot.slane %v444, 1
        %v446 = vadd.f32 %v444, %v445
        %s447 = vtos %v446
        %v448 = vstv %s447
        %449 = vst [vmem:[%s376] sm:$0xff] %v448
        %s450 = sand.u32 %s185, 1
        %s451 = scalar_lea.sflag [#allocation6], %s450
        %s452 = sand.u32 %s185, 1
        %s453 = smul.addr %s452, 8
        %s454 = scalar_lea.vmem [#allocation12], %s453
        // Predicated region
        $region61: #{tpu_custom_call.1} parent=43 // pred_check
          %p455 = pneg %p195
        $region62: #{tpu_custom_call.1} parent=43 // pred_check_branch
          %457 = sbr.rel (%p455) target = $region64
        $region63: #{tpu_custom_call.1} parent=43 // pred_region
          %s459 = ssub.s32 128, 128
          %460 = vsyncadd %s451, %s459
          %s461 = smul.addr %s31, 128
          %s462 = scalar_lea.hbm %s6, %s461
          %s464 = sshll.u32 %s454, 4
          %s465 = int_to_ptr.vmem [resolvable:$true] %s464
          %467 = dma.vmem_to_hbm [thread:$0]  %s465, 128, %s462, %s451
        $region64: #{tpu_custom_call.1} parent=43 // pred_fallthru
          _
      $region44: #{tpu_custom_call.1} parent=5 // pred_fallthru
        _
      %p468 = scmp.le.s32.totalorder 2, %s26
      // Predicated region
      $region65: #{tpu_custom_call.1} parent=5 // pred_check
        %p469 = pneg %p468
      $region66: #{tpu_custom_call.1} parent=5 // pred_check_branch
        %471 = sbr.rel (%p469) target = $region68
      $region67: #{tpu_custom_call.1} parent=5 // pred_region
        %s472 = ssub.s32 %s26, 2
        // Predicated region
        $region69: #{tpu_custom_call.1} parent=67 // pred_check
          %p473 = pneg %p201
        $region70: #{tpu_custom_call.1} parent=67 // pred_check_branch
          %475 = sbr.rel (%p473) target = $region72
        $region71: #{tpu_custom_call.1} parent=67 // pred_region
          %s476 = sand.u32 %s186, 1
          %s477 = scalar_lea.sflag [#allocation6], %s476
          %s478 = sand.u32 %s186, 1
          %s479 = smul.addr %s478, 8
          %s480 = scalar_lea.vmem [#allocation12], %s479
          %481 = dma.done %s477, 128
        $region72: #{tpu_custom_call.1} parent=67 // pred_fallthru
          _
      $region68: #{tpu_custom_call.1} parent=5 // pred_fallthru
        _
    $region6: #{tpu_custom_call.1} parent=1 // loop_footer
      %s30 = sadd.s32 1, %s26
    $region7: #{tpu_custom_call.1} parent=1 // loop_footer_branch
      %25 = sbr.rel target = $region3
    $region8: #{tpu_custom_call.1} parent=1 // loop_exit
      _
    %482 = vsyncpa [#allocation5], 1
    %s483 = scalar_lea.sflag [#allocation5], 1
    %484 = vsyncpa %s483, 1
    %485 = vsyncpa [#allocation8], 1
    %s486 = scalar_lea.sflag [#allocation8], 1
    %487 = vsyncpa %s486, 1
    %488 = vsyncpa [#allocation11], 1
    %s489 = scalar_lea.sflag [#allocation11], 1
    %490 = vsyncpa %s489, 1
    %491 = vsyncpa [#allocation6], 1
    %s492 = scalar_lea.sflag [#allocation6], 1
    %493 = vsyncpa %s492, 1

</llo_original>
